<compile_context>
chip_gen: v6e
topology: v6e:2x2x1
jax: 0.10.0
libtpu: 0.0.40
codegen_flags: <defaults>
</compile_context>

<pallas_src>
import functools

import jax
import jax.numpy as jnp
from jax.experimental import pallas as pl
from jax.experimental.pallas import tpu as pltpu


def _disc_kernel(h_ref, x_ref, xc_ref, w_ref, b_ref, out_ref):
    # h_ref : (tm, h_ft)   x_ref/xc_ref : (tm, x_ft)
    # w_ref : (h_ft, x_ft) b_ref : (1,) f32 in SMEM   out_ref : (2, tm)
    hw = jnp.dot(h_ref[...], w_ref[...], preferred_element_type=jnp.float32)  # MXU
    b = b_ref[0]
    r1 = jnp.sum(hw * x_ref[...], axis=-1) + b    # (tm,)
    r2 = jnp.sum(hw * xc_ref[...], axis=-1) + b   # (tm,)
    # Lane-dense stores: one full row of lanes per result.
    out_ref[0, :] = r1.astype(out_ref.dtype)
    out_ref[1, :] = r2.astype(out_ref.dtype)


def _round_up(a, b):
    return (a + b - 1) // b * b


@functools.partial(jax.jit, static_argnames=("tm",))
def discriminator_forward(h, x, x_c, weight, bias, *, tm=1024):
    """h: (B, N, h_ft), x/x_c: (B, N, x_ft), weight: (1, h_ft, x_ft), bias: (1,)."""
    B, N, h_ft = h.shape
    x_ft = x.shape[-1]
    M = B * N

    # Row tile: multiple of 128 (it becomes the lane dim of the output block),
    # clamped so tiny inputs are not massively over-padded.
    tm_eff = min(_round_up(tm, 128), _round_up(M, 128))
    M_pad = _round_up(M, tm_eff)

    h2 = h.reshape(M, h_ft).astype(jnp.float32)
    x2 = x.reshape(M, x_ft).astype(jnp.float32)
    xc2 = x_c.reshape(M, x_ft).astype(jnp.float32)
    # NOTE: casting h/x/x_c to bfloat16 here would halve HBM traffic on this
    # bandwidth-bound kernel (numerics tradeoff for the caller); kept f32 for
    # exact parity with the PyTorch module.
    if M_pad != M:
        pad = M_pad - M
        h2 = jnp.pad(h2, ((0, pad), (0, 0)))
        x2 = jnp.pad(x2, ((0, pad), (0, 0)))
        xc2 = jnp.pad(xc2, ((0, pad), (0, 0)))

    w2 = weight.reshape(h_ft, x_ft).astype(jnp.float32)
    b1 = bias.reshape(1).astype(jnp.float32)

    grid = (M_pad // tm_eff,)
    out = pl.pallas_call(
        _disc_kernel,
        out_shape=jax.ShapeDtypeStruct((2, M_pad), jnp.float32),
        grid_spec=pltpu.PrefetchScalarGridSpec(
            num_scalar_prefetch=0,
            grid=grid,
            in_specs=[
                pl.BlockSpec((tm_eff, h_ft), lambda i: (i, 0)),      # h rows
                pl.BlockSpec((tm_eff, x_ft), lambda i: (i, 0)),      # x rows
                pl.BlockSpec((tm_eff, x_ft), lambda i: (i, 0)),      # x_c rows
                pl.BlockSpec((h_ft, x_ft), lambda i: (0, 0)),        # full weight (resident)
                pl.BlockSpec(memory_space=pltpu.MemorySpace.SMEM),   # bias scalar
            ],
            out_specs=pl.BlockSpec((2, tm_eff), lambda i: (0, i)),   # lane-dense output
        ),
        compiler_params=pltpu.CompilerParams(
            dimension_semantics=("parallel",)),  # shardable across v7x's 2 TCs
    )(h2, x2, xc2, w2, b1)

    # Strip padding, back to (B, N, 2).
    return out[:, :M].T.reshape(B, N, 2)


def _reference(h, x, x_c, weight, bias):
    w = weight[0]
    r1 = jnp.einsum("bni,ij,bnj->bn", h, w, x) + bias[0]
    r2 = jnp.einsum("bni,ij,bnj->bn", h, w, x_c) + bias[0]
    return jnp.stack([r1, r2], axis=-1)


if __name__ == "__main__":
    # Small shapes consistent with the module: batch=2, seq(nodes)=8,
    # h_ft=32, x_ft=16.
    B, N, H_FT, X_FT = 2, 8, 32, 16

    key = jax.random.PRNGKey(0)
    kh, kx, kxc, kw, kb = jax.random.split(key, 5)

    h = jax.random.normal(kh, (B, N, H_FT), dtype=jnp.float32)
    x = jax.random.normal(kx, (B, N, X_FT), dtype=jnp.float32)
    x_c = jax.random.normal(kxc, (B, N, X_FT), dtype=jnp.float32)

    # nn.Bilinear init: U(-1/sqrt(h_ft), 1/sqrt(h_ft)) for weight (1,h_ft,x_ft) and bias (1,)
    bound = 1.0 / jnp.sqrt(jnp.float32(H_FT))
    weight = jax.random.uniform(kw, (1, H_FT, X_FT), jnp.float32, -bound, bound)
    bias = jax.random.uniform(kb, (1,), jnp.float32, -bound, bound)

    out = discriminator_forward(h, x, x_c, weight, bias)
    out = jax.block_until_ready(out)

    ref = _reference(h, x, x_c, weight, bias)
    assert out.shape == (B, N, 2), out.shape
    assert jnp.allclose(out, ref, atol=1e-4, rtol=1e-4), "mismatch vs reference"

    print("KERNEL_OK")
</pallas_src>

<mosaic_0001>
module attributes {stable_mosaic.version = 11 : i64} {
  func.func @_disc_kernel(%arg0: i32, %arg1: memref<128x32xf32, #tpu.memory_space<vmem>>, %arg2: memref<128x16xf32, #tpu.memory_space<vmem>>, %arg3: memref<128x16xf32, #tpu.memory_space<vmem>>, %arg4: memref<32x16xf32, #tpu.memory_space<vmem>>, %arg5: memref<1xf32, #tpu.memory_space<smem>>, %arg6: memref<2x128xf32, #tpu.memory_space<vmem>>) attributes {dimension_semantics = [#tpu.dimension_semantics<parallel>], iteration_bounds = array<i64: 1>, scalar_prefetch = 0 : i64, scratch_operands = 0 : i64, tpu.core_type = #tpu.core_type<tc>, window_params = [{transform_indices = @transform_0, window_bounds = array<i64: 128, 32>}, {transform_indices = @transform_1, window_bounds = array<i64: 128, 16>}, {transform_indices = @transform_2, window_bounds = array<i64: 128, 16>}, {pipeline_mode = #tpu.pipeline_mode<synchronous>, transform_indices = @transform_3, window_bounds = array<i64: 32, 16>}, {transform_indices = @transform_4, window_bounds = array<i64: 1>}, {transform_indices = @transform_5, window_bounds = array<i64: 2, 128>}]} {
    %c0 = arith.constant 0 : index
    %c0_0 = arith.constant 0 : index
    %0 = vector.load %arg1[%c0, %c0_0] : memref<128x32xf32, #tpu.memory_space<vmem>>, vector<128x32xf32>
    %c0_1 = arith.constant 0 : index
    %c0_2 = arith.constant 0 : index
    %1 = vector.load %arg4[%c0_1, %c0_2] : memref<32x16xf32, #tpu.memory_space<vmem>>, vector<32x16xf32>
    %cst = arith.constant dense<0.000000e+00> : vector<128x16xf32>
    %2 = tpu.matmul %0, %1, %cst {dimension_numbers = #tpu.dot_dimension_numbers<[1], [0], [0], [1], [0, 0, 1, 1], [], []>} : vector<128x32xf32>, vector<32x16xf32>, vector<128x16xf32> -> vector<128x16xf32>
    %c0_3 = arith.constant 0 : index
    %3 = memref.load %arg5[%c0_3] : memref<1xf32, #tpu.memory_space<smem>>
    %c0_4 = arith.constant 0 : index
    %c0_5 = arith.constant 0 : index
    %4 = vector.load %arg2[%c0_4, %c0_5] : memref<128x16xf32, #tpu.memory_space<vmem>>, vector<128x16xf32>
    %5 = arith.mulf %2, %4 : vector<128x16xf32>
    %cst_6 = arith.constant dense<0.000000e+00> : vector<128xf32>
    %6 = vector.multi_reduction <add>, %5, %cst_6 [1] : vector<128x16xf32> to vector<128xf32>
    %7 = vector.broadcast %3 : f32 to vector<128xf32>
    %8 = arith.addf %6, %7 : vector<128xf32>
    %c0_7 = arith.constant 0 : index
    %c0_8 = arith.constant 0 : index
    %9 = vector.load %arg3[%c0_7, %c0_8] : memref<128x16xf32, #tpu.memory_space<vmem>>, vector<128x16xf32>
    %10 = arith.mulf %2, %9 : vector<128x16xf32>
    %cst_9 = arith.constant dense<0.000000e+00> : vector<128xf32>
    %11 = vector.multi_reduction <add>, %10, %cst_9 [1] : vector<128x16xf32> to vector<128xf32>
    %12 = vector.broadcast %3 : f32 to vector<128xf32>
    %13 = arith.addf %11, %12 : vector<128xf32>
    %c0_10 = arith.constant 0 : index
    %c0_11 = arith.constant 0 : index
    %14 = vector.load %arg6[%c0_10, %c0_11] : memref<2x128xf32, #tpu.memory_space<vmem>>, vector<1x128xf32>
    %15 = vector.shape_cast %14 : vector<1x128xf32> to vector<128xf32>
    %16 = vector.shape_cast %8 : vector<128xf32> to vector<1x128xf32>
    tpu.vector_store %arg6[%c0_10, %c0_11], %16 {strides = array<i32>} : memref<2x128xf32, #tpu.memory_space<vmem>>, vector<1x128xf32>,
    %c1 = arith.constant 1 : index
    %c0_12 = arith.constant 0 : index
    %17 = vector.load %arg6[%c1, %c0_12] : memref<2x128xf32, #tpu.memory_space<vmem>>, vector<1x128xf32>
    %18 = vector.shape_cast %17 : vector<1x128xf32> to vector<128xf32>
    %19 = vector.shape_cast %13 : vector<128xf32> to vector<1x128xf32>
    tpu.vector_store %arg6[%c1, %c0_12], %19 {strides = array<i32>} : memref<2x128xf32, #tpu.memory_space<vmem>>, vector<1x128xf32>,
    return
  }
  func.func @transform_0(%arg0: i32) -> (i32, i32) {
    %c0_i32 = arith.constant 0 : i32
    %c0_i32_0 = arith.constant 0 : i32
    return %arg0, %c0_i32 : i32, i32
  }
  func.func @transform_1(%arg0: i32) -> (i32, i32) {
    %c0_i32 = arith.constant 0 : i32
    %c0_i32_0 = arith.constant 0 : i32
    return %arg0, %c0_i32 : i32, i32
  }
  func.func @transform_2(%arg0: i32) -> (i32, i32) {
    %c0_i32 = arith.constant 0 : i32
    %c0_i32_0 = arith.constant 0 : i32
    return %arg0, %c0_i32 : i32, i32
  }
  func.func @transform_3(%arg0: i32) -> (i32, i32) {
    %c0_i32 = arith.constant 0 : i32
    %c0_i32_0 = arith.constant 0 : i32
    %c0_i32_1 = arith.constant 0 : i32
    return %c0_i32, %c0_i32_0 : i32, i32
  }
  func.func @transform_4(%arg0: i32) -> i32 {
    %c0_i32 = arith.constant 0 : i32
    %c0_i32_0 = arith.constant 0 : i32
    return %c0_i32 : i32
  }
  func.func @transform_5(%arg0: i32) -> (i32, i32) {
    %c0_i32 = arith.constant 0 : i32
    %c0_i32_0 = arith.constant 0 : i32
    return %c0_i32, %arg0 : i32, i32
  }
}

</mosaic_0001>

<llo_original>
// kernel: discriminator_forward.1
$region0: #{discriminator_forward.1}
  #allocation0 [shape = 'u32[]', space=smem, size = 0x4, offset = 0x4, fixed_abs, tag = 'smem constant byte address 0x4 - core index']
  #allocation1 [shape = 'u32[144,128]{1,0:T(1,128)}', space=vmem, size = 0x12000, scoped, tag = 'internal scratch']
  #allocation2 [shape = 'f32[1]{0:T(128)S(6)}', space=smem, size = 0x200, scoped, tag = 'scoped memory for discriminator_forward.1']
  %s0 = inlined_call_operand.vmem [shape: f32[128,32], index: 0, kind: input, shape index: {}]
  %s1 = inlined_call_operand.vmem [shape: f32[128,16], index: 1, kind: input, shape index: {}]
  %s2 = inlined_call_operand.vmem [shape: f32[128,16], index: 2, kind: input, shape index: {}]
  %s3 = inlined_call_operand.vmem [shape: f32[32,16], index: 3, kind: input, shape index: {}]
  %s4 = inlined_call_operand.<no memory space> [shape: f32[1], index: 4, kind: input, shape index: {}]
  %s5 = inlined_call_operand.vmem [shape: f32[2,128], index: 5, kind: output, shape index: {}]
  %s6 = sld [smem:[#allocation0]]
  $region30: #{discriminator_forward.1} parent=0
    _
  %s8 = ssub.s32 1, %s6
  %s9 = scalar_select 0, %s8, %s6
  %10 = sst [smem:[#allocation2]] %s4
  // Predicated region
  $region2: #{discriminator_forward.1} parent=0 // pred_check
    _
  $region3: #{discriminator_forward.1} parent=0 // pred_check_branch
    %12 = sbr.rel (0) target = $region5
  $region4: #{discriminator_forward.1} parent=0 // pred_region
    _
  $region5: #{discriminator_forward.1} parent=0 // pred_fallthru
    _
  // Predicated region
  $region6: #{discriminator_forward.1} parent=0 // pred_check
    _
  $region7: #{discriminator_forward.1} parent=0 // pred_check_branch
    %14 = sbr.rel (0) target = $region9
  $region8: #{discriminator_forward.1} parent=0 // pred_region
    _
  $region9: #{discriminator_forward.1} parent=0 // pred_fallthru
    _
  // Predicated region
  $region10: #{discriminator_forward.1} parent=0 // pred_check
    _
  $region11: #{discriminator_forward.1} parent=0 // pred_check_branch
    %16 = sbr.rel (0) target = $region13
  $region12: #{discriminator_forward.1} parent=0 // pred_region
    _
  $region13: #{discriminator_forward.1} parent=0 // pred_fallthru
    _
  // Predicated region
  $region14: #{discriminator_forward.1} parent=0 // pred_check
    _
  $region15: #{discriminator_forward.1} parent=0 // pred_check_branch
    %18 = sbr.rel (0) target = $region17
  $region16: #{discriminator_forward.1} parent=0 // pred_region
    _
  $region17: #{discriminator_forward.1} parent=0 // pred_fallthru
    _
  // Predicated region
  $region18: #{discriminator_forward.1} parent=0 // pred_check
    _
  $region19: #{discriminator_forward.1} parent=0 // pred_check_branch
    %20 = sbr.rel (0) target = $region21
  $region20: #{discriminator_forward.1} parent=0 // pred_region
    _
  $region21: #{discriminator_forward.1} parent=0 // pred_fallthru
    _
  %v21 = vld [vmem:[%s0] sm:$0xff]
  %v22 = vld [vmem:[%s0 + $0x8] sm:$0xff]
  %v23 = vld [vmem:[%s0 + $0x10] sm:$0xff]
  %v24 = vld [vmem:[%s0 + $0x18] sm:$0xff]
  %v25 = vld [vmem:[%s0 + $0x20] sm:$0xff]
  %v26 = vld [vmem:[%s0 + $0x28] sm:$0xff]
  %v27 = vld [vmem:[%s0 + $0x30] sm:$0xff]
  %v28 = vld [vmem:[%s0 + $0x38] sm:$0xff]
  %v29 = vld [vmem:[%s0 + $0x40] sm:$0xff]
  %v30 = vld [vmem:[%s0 + $0x48] sm:$0xff]
  %v31 = vld [vmem:[%s0 + $0x50] sm:$0xff]
  %v32 = vld [vmem:[%s0 + $0x58] sm:$0xff]
  %v33 = vld [vmem:[%s0 + $0x60] sm:$0xff]
  %v34 = vld [vmem:[%s0 + $0x68] sm:$0xff]
  %v35 = vld [vmem:[%s0 + $0x70] sm:$0xff]
  %v36 = vld [vmem:[%s0 + $0x78] sm:$0xff]
  %v37 = vld [vmem:[%s3] sm:$0xff]
  %v38 = vld [vmem:[%s3 + $0x8] sm:$0xff]
  %v39 = vld [vmem:[%s3 + $0x10] sm:$0xff]
  %v40 = vld [vmem:[%s3 + $0x18] sm:$0xff]
  %vm41 = vcmask 261120
  %v43 = vsel %vm41, %v21, 0
  %v46 = vsel %vm41, %v22, 0
  %v49 = vsel %vm41, %v23, 0
  %v52 = vsel %vm41, %v24, 0
  %v55 = vsel %vm41, %v25, 0
  %v58 = vsel %vm41, %v26, 0
  %v61 = vsel %vm41, %v27, 0
  %v64 = vsel %vm41, %v28, 0
  %v67 = vsel %vm41, %v29, 0
  %v70 = vsel %vm41, %v30, 0
  %v73 = vsel %vm41, %v31, 0
  %v76 = vsel %vm41, %v32, 0
  %v79 = vsel %vm41, %v33, 0
  %v82 = vsel %vm41, %v34, 0
  %v85 = vsel %vm41, %v35, 0
  %v88 = vsel %vm41, %v36, 0
  %90 = vmatprep.subr.mxu0 0.0
  %91 = vmatpush1.msra.mxu0 0.0
  %92 = vmatprep.subr.mxu0 0.0
  %93 = vmatpush1.msra.mxu0 0.0
  %94 = vmatprep.subr.mxu0 0.0
  %95 = vmatpush1.msra.mxu0 0.0
  %96 = vmatprep.subr.mxu0 0.0
  %97 = vmatpush1.msra.mxu0 0.0
  %98 = vmatprep.subr.mxu0 0.0
  %99 = vmatpush1.msra.mxu0 0.0
  %100 = vmatprep.subr.mxu0 0.0
  %101 = vmatpush1.msra.mxu0 0.0
  %102 = vmatprep.subr.mxu0 0.0
  %103 = vmatpush1.msra.mxu0 0.0
  %104 = vmatprep.subr.mxu0 0.0
  %105 = vmatpush1.msra.mxu0 0.0
  %106 = vmatprep.subr.mxu0 0.0
  %107 = vmatpush1.msra.mxu0 0.0
  %108 = vmatprep.subr.mxu0 0.0
  %109 = vmatpush1.msra.mxu0 0.0
  %110 = vmatprep.subr.mxu0 0.0
  %111 = vmatpush1.msra.mxu0 0.0
  %112 = vmatprep.subr.mxu0 0.0
  %113 = vmatpush1.msra.mxu0 0.0
  %114 = vmatprep.subr.mxu0 0.0
  %115 = vmatpush1.msra.mxu0 %v40
  %116 = vmatprep.subr.mxu0 0.0
  %117 = vmatpush1.msra.mxu0 %v39
  %118 = vmatprep.subr.mxu0 0.0
  %119 = vmatpush1.msra.mxu0 %v38
  %120 = vmatprep.subr.mxu0 0.0
  %121 = vmatpush1.msra.mxu0 %v37
  %122 = vmatprep.subr.mxu0 0.0
  %123 = vmatpush2.msra.mxu0 0.0
  %124 = vmatprep.subr.mxu0 0.0
  %125 = vmatpush2.msra.mxu0 0.0
  %126 = vmatprep.subr.mxu0 0.0
  %127 = vmatpush2.msra.mxu0 0.0
  %128 = vmatprep.subr.mxu0 0.0
  %129 = vmatpush2.msra.mxu0 0.0
  %130 = vmatprep.subr.mxu0 0.0
  %131 = vmatpush2.msra.mxu0 0.0
  %132 = vmatprep.subr.mxu0 0.0
  %133 = vmatpush2.msra.mxu0 0.0
  %134 = vmatprep.subr.mxu0 0.0
  %135 = vmatpush2.msra.mxu0 0.0
  %136 = vmatprep.subr.mxu0 0.0
  %137 = vmatpush2.msra.mxu0 0.0
  %138 = vmatprep.subr.mxu0 0.0
  %139 = vmatpush2.msra.mxu0 0.0
  %140 = vmatprep.subr.mxu0 0.0
  %141 = vmatpush2.msra.mxu0 0.0
  %142 = vmatprep.subr.mxu0 0.0
  %143 = vmatpush2.msra.mxu0 0.0
  %144 = vmatprep.subr.mxu0 0.0
  %145 = vmatpush2.msra.mxu0 0.0
  %146 = vmatprep.subr.mxu0 0.0
  %147 = vmatpush2.msra.mxu0 0.0
  %148 = vmatprep.subr.mxu0 0.0
  %149 = vmatpush2.msra.mxu0 0.0
  %150 = vmatprep.subr.mxu0 0.0
  %151 = vmatpush2.msra.mxu0 0.0
  %152 = vmatprep.subr.mxu0 0.0
  %153 = vmatpush2.msra.mxu0 0.0
  %154 = vmatprep.mubr.f32.mxu0 0.0
  %155 = vmatmul.mubr.f32.gmra.mxu0 %v43
  %v156 = vpop.f32.mrf.mxu0
  %v157 = vadd.f32 0.0, %v156
  %v158 = vpop.f32.mrf.mxu0
  %159 = vmatprep.mubr.f32.mxu0 0.0
  %160 = vmatmul.mubr.f32.gmra.mxu0 %v46
  %v161 = vpop.f32.mrf.mxu0
  %v162 = vadd.f32 0.0, %v161
  %v163 = vpop.f32.mrf.mxu0
  %164 = vmatprep.mubr.f32.mxu0 0.0
  %165 = vmatmul.mubr.f32.gmra.mxu0 %v49
  %v166 = vpop.f32.mrf.mxu0
  %v167 = vadd.f32 0.0, %v166
  %v168 = vpop.f32.mrf.mxu0
  %169 = vmatprep.mubr.f32.mxu0 0.0
  %170 = vmatmul.mubr.f32.gmra.mxu0 %v52
  %v171 = vpop.f32.mrf.mxu0
  %v172 = vadd.f32 0.0, %v171
  %v173 = vpop.f32.mrf.mxu0
  %174 = vmatprep.mubr.f32.mxu0 0.0
  %175 = vmatmul.mubr.f32.gmra.mxu0 %v55
  %v176 = vpop.f32.mrf.mxu0
  %v177 = vadd.f32 0.0, %v176
  %v178 = vpop.f32.mrf.mxu0
  %179 = vmatprep.mubr.f32.mxu0 0.0
  %180 = vmatmul.mubr.f32.gmra.mxu0 %v58
  %v181 = vpop.f32.mrf.mxu0
  %v182 = vadd.f32 0.0, %v181
  %v183 = vpop.f32.mrf.mxu0
  %184 = vmatprep.mubr.f32.mxu0 0.0
  %185 = vmatmul.mubr.f32.gmra.mxu0 %v61
  %v186 = vpop.f32.mrf.mxu0
  %v187 = vadd.f32 0.0, %v186
  %v188 = vpop.f32.mrf.mxu0
  %189 = vmatprep.mubr.f32.mxu0 0.0
  %190 = vmatmul.mubr.f32.gmra.mxu0 %v64
  %v191 = vpop.f32.mrf.mxu0
  %v192 = vadd.f32 0.0, %v191
  %v193 = vpop.f32.mrf.mxu0
  %194 = vmatprep.mubr.f32.mxu0 0.0
  %195 = vmatmul.mubr.f32.gmra.mxu0 %v67
  %v196 = vpop.f32.mrf.mxu0
  %v197 = vadd.f32 0.0, %v196
  %v198 = vpop.f32.mrf.mxu0
  %199 = vmatprep.mubr.f32.mxu0 0.0
  %200 = vmatmul.mubr.f32.gmra.mxu0 %v70
  %v201 = vpop.f32.mrf.mxu0
  %v202 = vadd.f32 0.0, %v201
  %v203 = vpop.f32.mrf.mxu0
  %204 = vmatprep.mubr.f32.mxu0 0.0
  %205 = vmatmul.mubr.f32.gmra.mxu0 %v73
  %v206 = vpop.f32.mrf.mxu0
  %v207 = vadd.f32 0.0, %v206
  %v208 = vpop.f32.mrf.mxu0
  %209 = vmatprep.mubr.f32.mxu0 0.0
  %210 = vmatmul.mubr.f32.gmra.mxu0 %v76
  %v211 = vpop.f32.mrf.mxu0
  %v212 = vadd.f32 0.0, %v211
  %v213 = vpop.f32.mrf.mxu0
  %214 = vmatprep.mubr.f32.mxu0 0.0
  %215 = vmatmul.mubr.f32.gmra.mxu0 %v79
  %v216 = vpop.f32.mrf.mxu0
  %v217 = vadd.f32 0.0, %v216
  %v218 = vpop.f32.mrf.mxu0
  %219 = vmatprep.mubr.f32.mxu0 0.0
  %220 = vmatmul.mubr.f32.gmra.mxu0 %v82
  %v221 = vpop.f32.mrf.mxu0
  %v222 = vadd.f32 0.0, %v221
  %v223 = vpop.f32.mrf.mxu0
  %224 = vmatprep.mubr.f32.mxu0 0.0
  %225 = vmatmul.mubr.f32.gmra.mxu0 %v85
  %v226 = vpop.f32.mrf.mxu0
  %v227 = vadd.f32 0.0, %v226
  %v228 = vpop.f32.mrf.mxu0
  %229 = vmatprep.mubr.f32.mxu0 0.0
  %230 = vmatmul.mubr.f32.gmra.mxu0 %v88
  %v231 = vpop.f32.mrf.mxu0
  %v232 = vadd.f32 0.0, %v231
  %v233 = vpop.f32.mrf.mxu0
  %234 = vdwg.mxu0
  %s235 = sld [smem:[#allocation2]]
  %v236 = vld [vmem:[%s1] sm:$0xff]
  %v237 = vld [vmem:[%s1 + $0x8] sm:$0xff]
  %v238 = vld [vmem:[%s1 + $0x10] sm:$0xff]
  %v239 = vld [vmem:[%s1 + $0x18] sm:$0xff]
  %v240 = vld [vmem:[%s1 + $0x20] sm:$0xff]
  %v241 = vld [vmem:[%s1 + $0x28] sm:$0xff]
  %v242 = vld [vmem:[%s1 + $0x30] sm:$0xff]
  %v243 = vld [vmem:[%s1 + $0x38] sm:$0xff]
  %v244 = vld [vmem:[%s1 + $0x40] sm:$0xff]
  %v245 = vld [vmem:[%s1 + $0x48] sm:$0xff]
  %v246 = vld [vmem:[%s1 + $0x50] sm:$0xff]
  %v247 = vld [vmem:[%s1 + $0x58] sm:$0xff]
  %v248 = vld [vmem:[%s1 + $0x60] sm:$0xff]
  %v249 = vld [vmem:[%s1 + $0x68] sm:$0xff]
  %v250 = vld [vmem:[%s1 + $0x70] sm:$0xff]
  %v251 = vld [vmem:[%s1 + $0x78] sm:$0xff]
  %v252 = vmul.f32 %v157, %v236
  %v253 = vmul.f32 %v162, %v237
  %v254 = vmul.f32 %v167, %v238
  %v255 = vmul.f32 %v172, %v239
  %v256 = vmul.f32 %v177, %v240
  %v257 = vmul.f32 %v182, %v241
  %v258 = vmul.f32 %v187, %v242
  %v259 = vmul.f32 %v192, %v243
  %v260 = vmul.f32 %v197, %v244
  %v261 = vmul.f32 %v202, %v245
  %v262 = vmul.f32 %v207, %v246
  %v263 = vmul.f32 %v212, %v247
  %v264 = vmul.f32 %v217, %v248
  %v265 = vmul.f32 %v222, %v249
  %v266 = vmul.f32 %v227, %v250
  %v267 = vmul.f32 %v232, %v251
  %vm268 = vcmask 130048
  %v269 = vsel %vm268, %v252, 0.0
  %270 = vadd.xlane.f32.xlu0 %v269
  %v271 = vpop.xlane.xlu0 %270
  %v272 = vsel %vm268, %v253, 0.0
  %273 = vadd.xlane.f32.xlu0 %v272
  %v274 = vpop.xlane.xlu0 %273
  %v275 = vsel %vm268, %v254, 0.0
  %276 = vadd.xlane.f32.xlu0 %v275
  %v277 = vpop.xlane.xlu0 %276
  %v278 = vsel %vm268, %v255, 0.0
  %279 = vadd.xlane.f32.xlu0 %v278
  %v280 = vpop.xlane.xlu0 %279
  %v281 = vsel %vm268, %v256, 0.0
  %282 = vadd.xlane.f32.xlu0 %v281
  %v283 = vpop.xlane.xlu0 %282
  %v284 = vsel %vm268, %v257, 0.0
  %285 = vadd.xlane.f32.xlu0 %v284
  %v286 = vpop.xlane.xlu0 %285
  %v287 = vsel %vm268, %v258, 0.0
  %288 = vadd.xlane.f32.xlu0 %v287
  %v289 = vpop.xlane.xlu0 %288
  %v290 = vsel %vm268, %v259, 0.0
  %291 = vadd.xlane.f32.xlu0 %v290
  %v292 = vpop.xlane.xlu0 %291
  %v293 = vsel %vm268, %v260, 0.0
  %294 = vadd.xlane.f32.xlu0 %v293
  %v295 = vpop.xlane.xlu0 %294
  %v296 = vsel %vm268, %v261, 0.0
  %297 = vadd.xlane.f32.xlu0 %v296
  %v298 = vpop.xlane.xlu0 %297
  %v299 = vsel %vm268, %v262, 0.0
  %300 = vadd.xlane.f32.xlu0 %v299
  %v301 = vpop.xlane.xlu0 %300
  %v302 = vsel %vm268, %v263, 0.0
  %303 = vadd.xlane.f32.xlu0 %v302
  %v304 = vpop.xlane.xlu0 %303
  %v305 = vsel %vm268, %v264, 0.0
  %306 = vadd.xlane.f32.xlu0 %v305
  %v307 = vpop.xlane.xlu0 %306
  %v308 = vsel %vm268, %v265, 0.0
  %309 = vadd.xlane.f32.xlu0 %v308
  %v310 = vpop.xlane.xlu0 %309
  %v311 = vsel %vm268, %v266, 0.0
  %312 = vadd.xlane.f32.xlu0 %v311
  %v313 = vpop.xlane.xlu0 %312
  %v314 = vsel %vm268, %v267, 0.0
  %315 = vadd.xlane.f32.xlu0 %v314
  %v316 = vpop.xlane.xlu0 %315
  %v317 = vstv %s235
  %v318 = vadd.f32 %v271, %v317
  %v319 = vadd.f32 %v274, %v317
  %v320 = vadd.f32 %v277, %v317
  %v321 = vadd.f32 %v280, %v317
  %v322 = vadd.f32 %v283, %v317
  %v323 = vadd.f32 %v286, %v317
  %v324 = vadd.f32 %v289, %v317
  %v325 = vadd.f32 %v292, %v317
  %v326 = vadd.f32 %v295, %v317
  %v327 = vadd.f32 %v298, %v317
  %v328 = vadd.f32 %v301, %v317
  %v329 = vadd.f32 %v304, %v317
  %v330 = vadd.f32 %v307, %v317
  %v331 = vadd.f32 %v310, %v317
  %v332 = vadd.f32 %v313, %v317
  %v333 = vadd.f32 %v316, %v317
  %v334 = vld [vmem:[%s2] sm:$0xff]
  %v335 = vld [vmem:[%s2 + $0x8] sm:$0xff]
  %v336 = vld [vmem:[%s2 + $0x10] sm:$0xff]
  %v337 = vld [vmem:[%s2 + $0x18] sm:$0xff]
  %v338 = vld [vmem:[%s2 + $0x20] sm:$0xff]
  %v339 = vld [vmem:[%s2 + $0x28] sm:$0xff]
  %v340 = vld [vmem:[%s2 + $0x30] sm:$0xff]
  %v341 = vld [vmem:[%s2 + $0x38] sm:$0xff]
  %v342 = vld [vmem:[%s2 + $0x40] sm:$0xff]
  %v343 = vld [vmem:[%s2 + $0x48] sm:$0xff]
  %v344 = vld [vmem:[%s2 + $0x50] sm:$0xff]
  %v345 = vld [vmem:[%s2 + $0x58] sm:$0xff]
  %v346 = vld [vmem:[%s2 + $0x60] sm:$0xff]
  %v347 = vld [vmem:[%s2 + $0x68] sm:$0xff]
  %v348 = vld [vmem:[%s2 + $0x70] sm:$0xff]
  %v349 = vld [vmem:[%s2 + $0x78] sm:$0xff]
  %v350 = vmul.f32 %v157, %v334
  %v351 = vmul.f32 %v162, %v335
  %v352 = vmul.f32 %v167, %v336
  %v353 = vmul.f32 %v172, %v337
  %v354 = vmul.f32 %v177, %v338
  %v355 = vmul.f32 %v182, %v339
  %v356 = vmul.f32 %v187, %v340
  %v357 = vmul.f32 %v192, %v341
  %v358 = vmul.f32 %v197, %v342
  %v359 = vmul.f32 %v202, %v343
  %v360 = vmul.f32 %v207, %v344
  %v361 = vmul.f32 %v212, %v345
  %v362 = vmul.f32 %v217, %v346
  %v363 = vmul.f32 %v222, %v347
  %v364 = vmul.f32 %v227, %v348
  %v365 = vmul.f32 %v232, %v349
  %v366 = vsel %vm268, %v350, 0.0
  %367 = vadd.xlane.f32.xlu0 %v366
  %v368 = vpop.xlane.xlu0 %367
  %v369 = vsel %vm268, %v351, 0.0
  %370 = vadd.xlane.f32.xlu0 %v369
  %v371 = vpop.xlane.xlu0 %370
  %v372 = vsel %vm268, %v352, 0.0
  %373 = vadd.xlane.f32.xlu0 %v372
  %v374 = vpop.xlane.xlu0 %373
  %v375 = vsel %vm268, %v353, 0.0
  %376 = vadd.xlane.f32.xlu0 %v375
  %v377 = vpop.xlane.xlu0 %376
  %v378 = vsel %vm268, %v354, 0.0
  %379 = vadd.xlane.f32.xlu0 %v378
  %v380 = vpop.xlane.xlu0 %379
  %v381 = vsel %vm268, %v355, 0.0
  %382 = vadd.xlane.f32.xlu0 %v381
  %v383 = vpop.xlane.xlu0 %382
  %v384 = vsel %vm268, %v356, 0.0
  %385 = vadd.xlane.f32.xlu0 %v384
  %v386 = vpop.xlane.xlu0 %385
  %v387 = vsel %vm268, %v357, 0.0
  %388 = vadd.xlane.f32.xlu0 %v387
  %v389 = vpop.xlane.xlu0 %388
  %v390 = vsel %vm268, %v358, 0.0
  %391 = vadd.xlane.f32.xlu0 %v390
  %v392 = vpop.xlane.xlu0 %391
  %v393 = vsel %vm268, %v359, 0.0
  %394 = vadd.xlane.f32.xlu0 %v393
  %v395 = vpop.xlane.xlu0 %394
  %v396 = vsel %vm268, %v360, 0.0
  %397 = vadd.xlane.f32.xlu0 %v396
  %v398 = vpop.xlane.xlu0 %397
  %v399 = vsel %vm268, %v361, 0.0
  %400 = vadd.xlane.f32.xlu0 %v399
  %v401 = vpop.xlane.xlu0 %400
  %v402 = vsel %vm268, %v362, 0.0
  %403 = vadd.xlane.f32.xlu0 %v402
  %v404 = vpop.xlane.xlu0 %403
  %v405 = vsel %vm268, %v363, 0.0
  %406 = vadd.xlane.f32.xlu0 %v405
  %v407 = vpop.xlane.xlu0 %406
  %v408 = vsel %vm268, %v364, 0.0
  %409 = vadd.xlane.f32.xlu0 %v408
  %v410 = vpop.xlane.xlu0 %409
  %v411 = vsel %vm268, %v365, 0.0
  %412 = vadd.xlane.f32.xlu0 %v411
  %v413 = vpop.xlane.xlu0 %412
  %v414 = vadd.f32 %v368, %v317
  %v415 = vadd.f32 %v371, %v317
  %v416 = vadd.f32 %v374, %v317
  %v417 = vadd.f32 %v377, %v317
  %v418 = vadd.f32 %v380, %v317
  %v419 = vadd.f32 %v383, %v317
  %v420 = vadd.f32 %v386, %v317
  %v421 = vadd.f32 %v389, %v317
  %v422 = vadd.f32 %v392, %v317
  %v423 = vadd.f32 %v395, %v317
  %v424 = vadd.f32 %v398, %v317
  %v425 = vadd.f32 %v401, %v317
  %v426 = vadd.f32 %v404, %v317
  %v427 = vadd.f32 %v407, %v317
  %v428 = vadd.f32 %v410, %v317
  %v429 = vadd.f32 %v413, %v317
  %v446 = vlaneseq
  %v447 = vand.u32 %v446, 127
  %v448 = vlaneseq
  %v449 = vshrl.u32 %v448, 7
  %v450 = vsub.s32 %v447, %v449
  %v451 = vrot.slane %v318, %v450
  %v452 = vadd.s32 %v447, 4294967288
  %v453 = vlaneseq
  %v454 = vshrl.u32 %v453, 7
  %v455 = vsub.s32 %v452, %v454
  %v456 = vrot.slane %v319, %v455
  %vm457 = vcmask 130112
  %v458 = vsel %vm457, %v456, %v451
  %v459 = vadd.s32 %v447, 4294967280
  %v460 = vlaneseq
  %v461 = vshrl.u32 %v460, 7
  %v462 = vsub.s32 %v459, %v461
  %v463 = vrot.slane %v320, %v462
  %vm464 = vcmask 195712
  %v465 = vsel %vm464, %v463, %v458
  %v466 = vadd.s32 %v447, 4294967272
  %v467 = vlaneseq
  %v468 = vshrl.u32 %v467, 7
  %v469 = vsub.s32 %v466, %v468
  %v470 = vrot.slane %v321, %v469
  %vm471 = vcmask 261312
  %v472 = vsel %vm471, %v470, %v465
  %v473 = vadd.s32 %v447, 4294967264
  %v474 = vlaneseq
  %v475 = vshrl.u32 %v474, 7
  %v476 = vsub.s32 %v473, %v475
  %v477 = vrot.slane %v322, %v476
  %vm478 = vcmask 326912
  %v479 = vsel %vm478, %v477, %v472
  %v480 = vadd.s32 %v447, 4294967256
  %v481 = vlaneseq
  %v482 = vshrl.u32 %v481, 7
  %v483 = vsub.s32 %v480, %v482
  %v484 = vrot.slane %v323, %v483
  %vm485 = vcmask 392512
  %v486 = vsel %vm485, %v484, %v479
  %v487 = vadd.s32 %v447, 4294967248
  %v488 = vlaneseq
  %v489 = vshrl.u32 %v488, 7
  %v490 = vsub.s32 %v487, %v489
  %v491 = vrot.slane %v324, %v490
  %vm492 = vcmask 458112
  %v493 = vsel %vm492, %v491, %v486
  %v494 = vadd.s32 %v447, 4294967240
  %v495 = vlaneseq
  %v496 = vshrl.u32 %v495, 7
  %v497 = vsub.s32 %v494, %v496
  %v498 = vrot.slane %v325, %v497
  %vm499 = vcmask 523712
  %v500 = vsel %vm499, %v498, %v493
  %v501 = vadd.s32 %v447, 4294967232
  %v502 = vlaneseq
  %v503 = vshrl.u32 %v502, 7
  %v504 = vsub.s32 %v501, %v503
  %v505 = vrot.slane %v326, %v504
  %vm506 = vcmask 589312
  %v507 = vsel %vm506, %v505, %v500
  %v508 = vadd.s32 %v447, 4294967224
  %v509 = vlaneseq
  %v510 = vshrl.u32 %v509, 7
  %v511 = vsub.s32 %v508, %v510
  %v512 = vrot.slane %v327, %v511
  %vm513 = vcmask 654912
  %v514 = vsel %vm513, %v512, %v507
  %v515 = vadd.s32 %v447, 4294967216
  %v516 = vlaneseq
  %v517 = vshrl.u32 %v516, 7
  %v518 = vsub.s32 %v515, %v517
  %v519 = vrot.slane %v328, %v518
  %vm520 = vcmask 720512
  %v521 = vsel %vm520, %v519, %v514
  %v522 = vadd.s32 %v447, 4294967208
  %v523 = vlaneseq
  %v524 = vshrl.u32 %v523, 7
  %v525 = vsub.s32 %v522, %v524
  %v526 = vrot.slane %v329, %v525
  %vm527 = vcmask 786112
  %v528 = vsel %vm527, %v526, %v521
  %v529 = vadd.s32 %v447, 4294967200
  %v530 = vlaneseq
  %v531 = vshrl.u32 %v530, 7
  %v532 = vsub.s32 %v529, %v531
  %v533 = vrot.slane %v330, %v532
  %vm534 = vcmask 851712
  %v535 = vsel %vm534, %v533, %v528
  %v536 = vadd.s32 %v447, 4294967192
  %v537 = vlaneseq
  %v538 = vshrl.u32 %v537, 7
  %v539 = vsub.s32 %v536, %v538
  %v540 = vrot.slane %v331, %v539
  %vm541 = vcmask 917312
  %v542 = vsel %vm541, %v540, %v535
  %v543 = vadd.s32 %v447, 4294967184
  %v544 = vlaneseq
  %v545 = vshrl.u32 %v544, 7
  %v546 = vsub.s32 %v543, %v545
  %v547 = vrot.slane %v332, %v546
  %vm548 = vcmask 982912
  %v549 = vsel %vm548, %v547, %v542
  %v550 = vadd.s32 %v447, 4294967176
  %v551 = vlaneseq
  %v552 = vshrl.u32 %v551, 7
  %v553 = vsub.s32 %v550, %v552
  %v554 = vrot.slane %v333, %v553
  %vm555 = vcmask 1048512
  %v556 = vsel %vm555, %v554, %v549
  %558 = vst [vmem:[%s5] sm:$0x1] %v556
  %v575 = vlaneseq
  %v576 = vshrl.u32 %v575, 7
  %v577 = vsub.s32 %v447, %v576
  %v578 = vrot.slane %v414, %v577
  %v579 = vlaneseq
  %v580 = vshrl.u32 %v579, 7
  %v581 = vsub.s32 %v452, %v580
  %v582 = vrot.slane %v415, %v581
  %v583 = vsel %vm457, %v582, %v578
  %v584 = vlaneseq
  %v585 = vshrl.u32 %v584, 7
  %v586 = vsub.s32 %v459, %v585
  %v587 = vrot.slane %v416, %v586
  %v588 = vsel %vm464, %v587, %v583
  %v589 = vlaneseq
  %v590 = vshrl.u32 %v589, 7
  %v591 = vsub.s32 %v466, %v590
  %v592 = vrot.slane %v417, %v591
  %v593 = vsel %vm471, %v592, %v588
  %v594 = vlaneseq
  %v595 = vshrl.u32 %v594, 7
  %v596 = vsub.s32 %v473, %v595
  %v597 = vrot.slane %v418, %v596
  %v598 = vsel %vm478, %v597, %v593
  %v599 = vlaneseq
  %v600 = vshrl.u32 %v599, 7
  %v601 = vsub.s32 %v480, %v600
  %v602 = vrot.slane %v419, %v601
  %v603 = vsel %vm485, %v602, %v598
  %v604 = vlaneseq
  %v605 = vshrl.u32 %v604, 7
  %v606 = vsub.s32 %v487, %v605
  %v607 = vrot.slane %v420, %v606
  %v608 = vsel %vm492, %v607, %v603
  %v609 = vlaneseq
  %v610 = vshrl.u32 %v609, 7
  %v611 = vsub.s32 %v494, %v610
  %v612 = vrot.slane %v421, %v611
  %v613 = vsel %vm499, %v612, %v608
  %v614 = vlaneseq
  %v615 = vshrl.u32 %v614, 7
  %v616 = vsub.s32 %v501, %v615
  %v617 = vrot.slane %v422, %v616
  %v618 = vsel %vm506, %v617, %v613
  %v619 = vlaneseq
  %v620 = vshrl.u32 %v619, 7
  %v621 = vsub.s32 %v508, %v620
  %v622 = vrot.slane %v423, %v621
  %v623 = vsel %vm513, %v622, %v618
  %v624 = vlaneseq
  %v625 = vshrl.u32 %v624, 7
  %v626 = vsub.s32 %v515, %v625
  %v627 = vrot.slane %v424, %v626
  %v628 = vsel %vm520, %v627, %v623
  %v629 = vlaneseq
  %v630 = vshrl.u32 %v629, 7
  %v631 = vsub.s32 %v522, %v630
  %v632 = vrot.slane %v425, %v631
  %v633 = vsel %vm527, %v632, %v628
  %v634 = vlaneseq
  %v635 = vshrl.u32 %v634, 7
  %v636 = vsub.s32 %v529, %v635
  %v637 = vrot.slane %v426, %v636
  %v638 = vsel %vm534, %v637, %v633
  %v639 = vlaneseq
  %v640 = vshrl.u32 %v639, 7
  %v641 = vsub.s32 %v536, %v640
  %v642 = vrot.slane %v427, %v641
  %v643 = vsel %vm541, %v642, %v638
  %v644 = vlaneseq
  %v645 = vshrl.u32 %v644, 7
  %v646 = vsub.s32 %v543, %v645
  %v647 = vrot.slane %v428, %v646
  %v648 = vsel %vm548, %v647, %v643
  %v649 = vlaneseq
  %v650 = vshrl.u32 %v649, 7
  %v651 = vsub.s32 %v550, %v650
  %v652 = vrot.slane %v429, %v651
  %v653 = vsel %vm555, %v652, %v648
  %655 = vst [vmem:[%s5 + $0x1] sm:$0x1] %v653
  // Predicated region
  $region22: #{discriminator_forward.1} parent=0 // pred_check
    _
  $region23: #{discriminator_forward.1} parent=0 // pred_check_branch
    %657 = sbr.rel (0) target = $region25
  $region24: #{discriminator_forward.1} parent=0 // pred_region
    _
  $region25: #{discriminator_forward.1} parent=0 // pred_fallthru
    _
  // Predicated region
  $region26: #{discriminator_forward.1} parent=0 // pred_check
    _
  $region27: #{discriminator_forward.1} parent=0 // pred_check_branch
    %659 = sbr.rel (0) target = $region29
  $region28: #{discriminator_forward.1} parent=0 // pred_region
    _
  $region29: #{discriminator_forward.1} parent=0 // pred_fallthru
    _

</llo_original>
